<compile_context>
chip_gen: v7x
topology: tpu7x:2x2x1
jax: 0.10.0
libtpu: 0.0.40
codegen_flags: <defaults>
</compile_context>

<pallas_src>
import functools
import math

import jax
import jax.numpy as jnp
from jax.experimental import pallas as pl
from jax.experimental.pallas import tpu as pltpu

TM_MAX = 128                       # max row tile for the GEMM kernels
VMEM_LIMIT = 48 * 1024 * 1024      # stay under v7x's 64 MiB physical VMEM


def _round_up(x, m):
    return (x + m - 1) // m * m


def _pick_tn(cout):
    """Output-channel tile: 256/128 when divisible, else the full (small) cout."""
    if cout % 256 == 0:
        return 256
    if cout % 128 == 0:
        return 128
    return cout


# ----------------------------------------------------------------------------
# Pallas kernels (cached per shape signature so repeated ResNet blocks reuse
# the same compiled executable).
# ----------------------------------------------------------------------------
@functools.lru_cache(maxsize=None)
def _fused_matmul_fn(m_pad, k, n, tm, tn, relu, fuse_add):
    """out = maybe_relu((A @ B) * scale + bias [+ identity])

    A: (m_pad, k) bf16, B: (k, n) bf16, scale/bias: (1, n) f32,
    identity (optional): (m_pad, n) f32, out: (m_pad, n) f32.
    Grid: (m_pad//tm, n//tn), both axes "parallel" (distinct output tiles).
    """

    def _epilogue(acc, s, c, ident):
        acc = acc * s + c
        if ident is not None:
            acc = acc + ident
        if relu:
            acc = jnp.maximum(acc, 0.0)
        return acc

    def kernel_base(a_ref, b_ref, s_ref, c_ref, o_ref):
        acc = jnp.dot(a_ref[...], b_ref[...], preferred_element_type=jnp.float32)
        o_ref[...] = _epilogue(acc, s_ref[...], c_ref[...], None).astype(o_ref.dtype)

    def kernel_fused(a_ref, b_ref, s_ref, c_ref, id_ref, o_ref):
        acc = jnp.dot(a_ref[...], b_ref[...], preferred_element_type=jnp.float32)
        o_ref[...] = _epilogue(acc, s_ref[...], c_ref[...], id_ref[...]).astype(o_ref.dtype)

    in_specs = [
        pl.BlockSpec((tm, k), lambda i, j: (i, 0)),     # A row tile (full K)
        pl.BlockSpec((k, tn), lambda i, j: (0, j)),     # weight column tile (grid-invariant in i)
        pl.BlockSpec((1, tn), lambda i, j: (0, j)),     # BN scale
        pl.BlockSpec((1, tn), lambda i, j: (0, j)),     # BN bias
    ]
    kernel = kernel_base
    if fuse_add:
        in_specs.append(pl.BlockSpec((tm, tn), lambda i, j: (i, j)))  # residual identity
        kernel = kernel_fused

    f = pl.pallas_call(
        kernel,
        out_shape=jax.ShapeDtypeStruct((m_pad, n), jnp.float32),
        grid_spec=pltpu.PrefetchScalarGridSpec(
            num_scalar_prefetch=0,
            grid=(m_pad // tm, n // tn),
            in_specs=in_specs,
            out_specs=pl.BlockSpec((tm, tn), lambda i, j: (i, j)),
        ),
        compiler_params=pltpu.CompilerParams(
            dimension_semantics=("parallel", "parallel"),
            vmem_limit_bytes=VMEM_LIMIT,
        ),
    )
    return jax.jit(f)


@functools.lru_cache(maxsize=None)
def _maxpool_fn(m_pad, tile, kk, c):
    """out[m, c] = max over window axis of patches (m_pad, kk, c)."""

    def kernel(p_ref, o_ref):
        o_ref[...] = jnp.max(p_ref[...], axis=1)

    f = pl.pallas_call(
        kernel,
        out_shape=jax.ShapeDtypeStruct((m_pad, c), jnp.float32),
        grid_spec=pltpu.PrefetchScalarGridSpec(
            num_scalar_prefetch=0,
            grid=(m_pad // tile,),
            in_specs=[pl.BlockSpec((tile, kk, c), lambda i: (i, 0, 0))],
            out_specs=pl.BlockSpec((tile, c), lambda i: (i, 0)),
        ),
        compiler_params=pltpu.CompilerParams(
            dimension_semantics=("parallel",),
            vmem_limit_bytes=VMEM_LIMIT,
        ),
    )
    return jax.jit(f)


@functools.lru_cache(maxsize=None)
def _head_fn(n, hw, c):
    """Fused global-average-pool + fc(c -> 1): out[n,0] = mean_hw(x[n]) . w + b (VPU reduction)."""
    inv_hw = 1.0 / float(hw)

    def kernel(x_ref, w_ref, b_ref, o_ref):
        s = jnp.sum(x_ref[...] * w_ref[...], axis=-1)               # (n, hw)
        o_ref[...] = jnp.sum(s, axis=-1, keepdims=True) * inv_hw + b_ref[...]

    f = pl.pallas_call(
        kernel,
        out_shape=jax.ShapeDtypeStruct((n, 1), jnp.float32),
        grid_spec=pltpu.PrefetchScalarGridSpec(
            num_scalar_prefetch=0,
            grid=(1,),
            in_specs=[
                pl.BlockSpec((n, hw, c), lambda i: (0, 0, 0)),
                pl.BlockSpec((1, 1, c), lambda i: (0, 0, 0)),
                pl.BlockSpec((1, 1), lambda i: (0, 0)),
            ],
            out_specs=pl.BlockSpec((n, 1), lambda i: (0, 0)),
        ),
        compiler_params=pltpu.CompilerParams(vmem_limit_bytes=VMEM_LIMIT),
    )
    return jax.jit(f)


# ----------------------------------------------------------------------------
# Plain-JAX glue (patch extraction, padding, reshapes).
# ----------------------------------------------------------------------------
def _extract_patches(x, kh, kw, stride, pad, pad_value=0.0):
    """x: NHWC -> patches (N, Ho, Wo, kh*kw, C)."""
    n, h, w, c = x.shape
    xp = jnp.pad(x, ((0, 0), (pad, pad), (pad, pad), (0, 0)), constant_values=pad_value)
    ho = (h + 2 * pad - kh) // stride + 1
    wo = (w + 2 * pad - kw) // stride + 1
    cols = []
    for i in range(kh):
        for j in range(kw):
            cols.append(xp[:, i:i + ho * stride:stride, j:j + wo * stride:stride, :])
    patches = jnp.stack(cols, axis=3)
    return patches, ho, wo


def conv_bn(x, w, scale, bias, stride=1, pad=0, relu=True, residual=None):
    """x: NHWC f32, w: (kh, kw, Cin, Cout) f32.

    Conv (no bias) + folded-BN (+ optional fused residual add) (+ optional ReLU) via the
    fused Pallas GEMM.  GEMM operands run in bf16, accumulation/epilogue in f32.
    """
    kh, kw, cin, cout = w.shape
    n = x.shape[0]
    xb = x.astype(jnp.bfloat16)
    if kh == 1 and kw == 1 and pad == 0:
        xs = xb[:, ::stride, ::stride, :]
        _, ho, wo, _ = xs.shape
        a = xs.reshape(n * ho * wo, cin)
    else:
        # TODO(synk): im2col still materializes a kh*kw-inflated patch tensor (bf16) in HBM.
        patches, ho, wo = _extract_patches(xb, kh, kw, stride, pad)
        a = patches.reshape(n * ho * wo, kh * kw * cin)
    b = w.reshape(kh * kw * cin, cout).astype(jnp.bfloat16)

    m, k = a.shape
    tm = min(TM_MAX, _round_up(m, 16))          # adaptive M tile (bf16 sublane packing = 16)
    m_pad = _round_up(m, tm)
    tn = _pick_tn(cout)
    if m_pad != m:
        a = jnp.pad(a, ((0, m_pad - m), (0, 0)))

    args = [a, b,
            scale.reshape(1, cout).astype(jnp.float32),
            bias.reshape(1, cout).astype(jnp.float32)]
    fuse_add = residual is not None
    if fuse_add:
        idf = residual.reshape(m, cout).astype(jnp.float32)
        if m_pad != m:
            idf = jnp.pad(idf, ((0, m_pad - m), (0, 0)))
        args.append(idf)

    out = _fused_matmul_fn(m_pad, k, cout, tm, tn, bool(relu), fuse_add)(*args)
    return out[:m].reshape(n, ho, wo, cout)


def maxpool_3x3_s2(x):
    n, h, w, c = x.shape
    patches, ho, wo = _extract_patches(x, 3, 3, 2, 1, pad_value=-jnp.inf)
    m = n * ho * wo
    p = patches.reshape(m, 9, c)
    tile = 512 if m >= 512 else _round_up(m, 8)   # big row tiles: HBM-bandwidth bound
    m_pad = _round_up(m, tile)
    if m_pad != m:
        p = jnp.pad(p, ((0, m_pad - m), (0, 0), (0, 0)))
    out = _maxpool_fn(m_pad, tile, 9, c)(p)
    return out[:m].reshape(n, ho, wo, c)


def head(x, fc_w, fc_b):
    """Fused global average pool + Linear(2048 -> 1)."""
    n, h, w, c = x.shape
    return _head_fn(n, h * w, c)(
        x.reshape(n, h * w, c),
        fc_w.reshape(1, 1, c),
        fc_b.reshape(1, 1),
    )


# ----------------------------------------------------------------------------
# Deterministic parameter construction (synthetic — no checkpoint load).
# ----------------------------------------------------------------------------
class ParamGen:
    def __init__(self, key):
        self.key = key

    def next(self):
        self.key, sub = jax.random.split(self.key)
        return sub


def make_conv(pg, kh, kw, cin, cout):
    fan_in = kh * kw * cin
    w = jax.random.normal(pg.next(), (kh, kw, cin, cout), jnp.float32) / math.sqrt(fan_in)
    gamma = 1.0 + 0.1 * jax.random.normal(pg.next(), (cout,), jnp.float32)
    beta = 0.1 * jax.random.normal(pg.next(), (cout,), jnp.float32)
    mean = 0.1 * jax.random.normal(pg.next(), (cout,), jnp.float32)
    var = 1.0 + 0.1 * jnp.abs(jax.random.normal(pg.next(), (cout,), jnp.float32))
    eps = 1e-5
    s = gamma / jnp.sqrt(var + eps)
    return {"w": w, "scale": s, "bias": beta - mean * s}


def init_bottleneck(pg, cin, width, stride):
    p = {
        "conv1": make_conv(pg, 1, 1, cin, width),
        "conv2": make_conv(pg, 3, 3, width, width),
        "conv3": make_conv(pg, 1, 1, width, width * 4),
    }
    if stride != 1 or cin != width * 4:
        p["down"] = make_conv(pg, 1, 1, cin, width * 4)
    return p


def init_layer(pg, cin, width, blocks, stride):
    ps = [init_bottleneck(pg, cin, width, stride)]
    for _ in range(blocks - 1):
        ps.append(init_bottleneck(pg, width * 4, width, 1))
    return ps


def init_drew3(key):
    pg = ParamGen(key)
    params = {
        "conv1": make_conv(pg, 7, 7, 3, 64),
        "layer1": init_layer(pg, 64, 64, 3, 1),
        "layer2": init_layer(pg, 256, 128, 4, 2),
        "layer3": init_layer(pg, 512, 256, 6, 2),
        "layer4": init_layer(pg, 1024, 512, 3, 2),
        "fc_w": jax.random.normal(pg.next(), (2048, 1), jnp.float32) / math.sqrt(2048),
        "fc_b": 0.01 * jax.random.normal(pg.next(), (1,), jnp.float32),
    }
    return params


# ----------------------------------------------------------------------------
# Forward pass (ResNet-50 with 1-unit head).
# ----------------------------------------------------------------------------
def bottleneck_forward(p, x, stride):
    if "down" in p:
        identity = conv_bn(x, **p["down"], stride=stride, pad=0, relu=False)
    else:
        identity = x
    out = conv_bn(x, **p["conv1"], stride=1, pad=0, relu=True)
    out = conv_bn(out, **p["conv2"], stride=stride, pad=1, relu=True)
    # residual add + ReLU fused into the conv3 GEMM epilogue
    out = conv_bn(out, **p["conv3"], stride=1, pad=0, relu=True, residual=identity)
    return out


def layer_forward(ps, x, stride):
    x = bottleneck_forward(ps[0], x, stride)
    for p in ps[1:]:
        x = bottleneck_forward(p, x, 1)
    return x


def drew3_forward(params, image_nchw):
    x = jnp.transpose(image_nchw, (0, 2, 3, 1))          # NCHW -> NHWC
    # Stem: pad Cin 3 -> 4 (zero channel + zero weights) so im2col K is not a ragged 147 lanes.
    x = jnp.pad(x, ((0, 0), (0, 0), (0, 0), (0, 1)))
    stem = params["conv1"]
    w7 = jnp.pad(stem["w"], ((0, 0), (0, 0), (0, 1), (0, 0)))
    x = conv_bn(x, w7, stem["scale"], stem["bias"], stride=2, pad=3, relu=True)
    x = maxpool_3x3_s2(x)
    x = layer_forward(params["layer1"], x, 1)
    x = layer_forward(params["layer2"], x, 2)
    x = layer_forward(params["layer3"], x, 2)
    x = layer_forward(params["layer4"], x, 2)
    score = head(x, params["fc_w"], params["fc_b"])       # fused GAP + fc -> (N, 1)
    return score


if __name__ == "__main__":
    key = jax.random.PRNGKey(0)
    k_img, k_params = jax.random.split(key)
    image = jax.random.normal(k_img, (2, 3, 64, 64), jnp.float32)  # NCHW, like PyTorch
    params = init_drew3(k_params)

    score = drew3_forward(params, image)
    score = jax.block_until_ready(score)

    assert score.shape == (2, 1), score.shape
    assert bool(jnp.all(jnp.isfinite(score)))
    print("KERNEL_OK")
</pallas_src>

<mosaic_0001>
module attributes {stable_mosaic.version = 11 : i64} {
  func.func @kernel_base(%arg0: i32, %arg1: i32, %arg2: memref<128x196xbf16, #tpu.memory_space<vmem>>, %arg3: memref<196x64xbf16, #tpu.memory_space<vmem>>, %arg4: memref<1x64xf32, #tpu.memory_space<vmem>>, %arg5: memref<1x64xf32, #tpu.memory_space<vmem>>, %arg6: memref<128x64xf32, #tpu.memory_space<vmem>>) attributes {dimension_semantics = [#tpu.dimension_semantics<parallel>, #tpu.dimension_semantics<parallel>], iteration_bounds = array<i64: 16, 1>, scalar_prefetch = 0 : i64, scratch_operands = 0 : i64, tpu.core_type = #tpu.core_type<tc>, window_params = [{transform_indices = @transform_0, window_bounds = array<i64: 128, 196>}, {transform_indices = @transform_1, window_bounds = array<i64: 196, 64>}, {transform_indices = @transform_2, window_bounds = array<i64: 1, 64>}, {transform_indices = @transform_3, window_bounds = array<i64: 1, 64>}, {transform_indices = @transform_4, window_bounds = array<i64: 128, 64>}]} {
    %c0 = arith.constant 0 : index
    %c0_0 = arith.constant 0 : index
    %0 = vector.load %arg2[%c0, %c0_0] : memref<128x196xbf16, #tpu.memory_space<vmem>>, vector<128x196xbf16>
    %c0_1 = arith.constant 0 : index
    %c0_2 = arith.constant 0 : index
    %1 = vector.load %arg3[%c0_1, %c0_2] : memref<196x64xbf16, #tpu.memory_space<vmem>>, vector<196x64xbf16>
    %cst = arith.constant dense<0.000000e+00> : vector<128x64xf32>
    %2 = tpu.matmul %0, %1, %cst {dimension_numbers = #tpu.dot_dimension_numbers<[1], [0], [0], [1], [0, 0, 1, 1], [], []>} : vector<128x196xbf16>, vector<196x64xbf16>, vector<128x64xf32> -> vector<128x64xf32>
    %c0_3 = arith.constant 0 : index
    %c0_4 = arith.constant 0 : index
    %3 = vector.load %arg4[%c0_3, %c0_4] : memref<1x64xf32, #tpu.memory_space<vmem>>, vector<1x64xf32>
    %c0_5 = arith.constant 0 : index
    %c0_6 = arith.constant 0 : index
    %4 = vector.load %arg5[%c0_5, %c0_6] : memref<1x64xf32, #tpu.memory_space<vmem>>, vector<1x64xf32>
    %5 = vector.broadcast %3 : vector<1x64xf32> to vector<128x64xf32>
    %6 = arith.mulf %2, %5 : vector<128x64xf32>
    %7 = vector.broadcast %4 : vector<1x64xf32> to vector<128x64xf32>
    %8 = arith.addf %6, %7 : vector<128x64xf32>
    %cst_7 = arith.constant 0.000000e+00 : f32
    %9 = vector.broadcast %cst_7 : f32 to vector<128x64xf32>
    %10 = arith.maximumf %8, %9 : vector<128x64xf32>
    %c0_8 = arith.constant 0 : index
    %c0_9 = arith.constant 0 : index
    %11 = vector.load %arg6[%c0_8, %c0_9] : memref<128x64xf32, #tpu.memory_space<vmem>>, vector<128x64xf32>
    tpu.vector_store %arg6[%c0_8, %c0_9], %10 {strides = array<i32>} : memref<128x64xf32, #tpu.memory_space<vmem>>, vector<128x64xf32>,
    return
  }
  func.func @transform_0(%arg0: i32, %arg1: i32) -> (i32, i32) {
    %c0_i32 = arith.constant 0 : i32
    %c0_i32_0 = arith.constant 0 : i32
    return %arg0, %c0_i32 : i32, i32
  }
  func.func @transform_1(%arg0: i32, %arg1: i32) -> (i32, i32) {
    %c0_i32 = arith.constant 0 : i32
    %c0_i32_0 = arith.constant 0 : i32
    return %c0_i32, %arg1 : i32, i32
  }
  func.func @transform_2(%arg0: i32, %arg1: i32) -> (i32, i32) {
    %c0_i32 = arith.constant 0 : i32
    %c0_i32_0 = arith.constant 0 : i32
    return %c0_i32, %arg1 : i32, i32
  }
  func.func @transform_3(%arg0: i32, %arg1: i32) -> (i32, i32) {
    %c0_i32 = arith.constant 0 : i32
    %c0_i32_0 = arith.constant 0 : i32
    return %c0_i32, %arg1 : i32, i32
  }
  func.func @transform_4(%arg0: i32, %arg1: i32) -> (i32, i32) {
    %c0_i32 = arith.constant 0 : i32
    return %arg0, %arg1 : i32, i32
  }
}

</mosaic_0001>

<llo_original>
// kernel: tpu_custom_call.1
$region0: #{tpu_custom_call.1}
  #allocation0 [shape = 'u32[]', space=smem, size = 0x4, offset = 0x4, fixed_abs, tag = 'smem constant byte address 0x4 - core index']
  #allocation1 [shape = 'u32[144,128]{1,0:T(1,128)}', space=vmem, size = 0x12000, scoped, tag = 'internal scratch']
  %s0 = inlined_call_operand.vmem [shape: bf16[2048,196], index: 0, kind: input, shape index: {}]
  %s1 = inlined_call_operand.vmem [shape: bf16[196,64], index: 1, kind: input, shape index: {}]
  %s2 = inlined_call_operand.vmem [shape: f32[1,64], index: 2, kind: input, shape index: {}]
  %s3 = inlined_call_operand.vmem [shape: f32[1,64], index: 3, kind: input, shape index: {}]
  %s4 = inlined_call_operand.vmem [shape: f32[2048,64], index: 4, kind: output, shape index: {}]
  %s5 = sld [smem:[#allocation0]]
  $region49: #{tpu_custom_call.1} parent=0
    _
  %s7 = ssub.s32 1, %s5
  %s8 = scalar_select 0, %s7, %s5
  loop: start=0, step=1, limit=18
  $region2: #{tpu_custom_call.1} parent=0 // loop_pre_header
    _
  $region3: #{tpu_custom_call.1} parent=0 // loop_header
    %s10 = sphi 0, %s14
    %p11 = scmp.ge.s32.totalorder %s10, 18
    %s17 = sphi 0, %s29
    %s18 = sphi 0, %s25
    %s19 = sphi 0, %s17
    %s20 = sphi 0, %s18
    %s21 = sphi 0, %s19
    %s22 = sphi 0, %s20
    %s32 = sphi 0, %s34
    %s35 = sphi 0, %s32
    %s36 = sphi 0, %s35
    %s52 = sphi 0, %s36
    %s58 = sphi 0, %s60
    %s61 = sphi 0, %s58
    %s62 = sphi 0, %s61
    %s78 = sphi 0, %s62
    %s84 = sphi 0, %s86
    %s87 = sphi 0, %s84
    %s88 = sphi 0, %s87
    %s104 = sphi 0, %s88
    %s110 = sphi 0, %s112
    %s113 = sphi 0, %s110
    %s114 = sphi 0, %s113
    %s130 = sphi 0, %s114
    %s138 = sphi 0, %s140
    %s141 = sphi 0, %s138
    %s142 = sphi 0, %s141
    %s158 = sphi 0, %s142
  $region4: #{tpu_custom_call.1} parent=0 // loop_header_branch
    %13 = sbr.rel (%p11) target = $region8
  $region5: #{tpu_custom_call.1} parent=0 // loop_body
    %s15 = ssub.s32 %s10, 1
    %s16 = ssub.s32 %s10, 2
    %s23 = sadd.s32 1, %s18
    %p24 = scmp.ge.s32.totalorder %s23, 1
    %s25 = scalar_select %p24, 0, %s23
    %s26 = sadd.s32 1, %s17
    %s27 = scalar_select %p24, %s26, %s17
    %p28 = scmp.ge.s32.totalorder %s27, 16
    %s29 = scalar_select %p28, 0, %s27
    %s30 = ssub.s32 %s17, %s29
    %p31 = scmp.eq.s32.totalorder %s30, 0
    %s33 = sadd.s32 %s32, 1
    %s34 = scalar_select %p31, %s32, %s33
    %p37 = pneg %p31
    %p38 = scmp.eq.s32.totalorder %s10, 15
    %p39 = por %p37, %p38
    %p40 = scmp.ne.s32.totalorder %s32, %s35
    %p41 = scmp.eq.s32.totalorder %s10, 0
    %p42 = por %p40, %p41
    %p43 = scmp.ne.s32.totalorder %s32, %s35
    %p44 = scmp.eq.s32.totalorder %s15, 15
    %p45 = por %p43, %p44
    %p46 = scmp.ne.s32.totalorder %s35, %s36
    %p47 = scmp.eq.s32.totalorder %s15, 0
    %p48 = por %p46, %p47
    %p49 = scmp.ne.s32.totalorder %s35, %s36
    %p50 = scmp.eq.s32.totalorder %s16, 15
    %p51 = por %p49, %p50
    %p53 = scmp.ne.s32.totalorder %s36, %s52
    %p54 = scmp.eq.s32.totalorder %s16, 0
    %p55 = por %p53, %p54
    %s56 = ssub.s32 %s18, %s25
    %p57 = scmp.eq.s32.totalorder %s56, 0
    %s59 = sadd.s32 %s58, 1
    %s60 = scalar_select %p57, %s58, %s59
    %p63 = pneg %p57
    %p64 = scmp.eq.s32.totalorder %s10, 15
    %p65 = por %p63, %p64
    %p66 = scmp.ne.s32.totalorder %s58, %s61
    %p67 = scmp.eq.s32.totalorder %s10, 0
    %p68 = por %p66, %p67
    %p69 = scmp.ne.s32.totalorder %s58, %s61
    %p70 = scmp.eq.s32.totalorder %s15, 15
    %p71 = por %p69, %p70
    %p72 = scmp.ne.s32.totalorder %s61, %s62
    %p73 = scmp.eq.s32.totalorder %s15, 0
    %p74 = por %p72, %p73
    %p75 = scmp.ne.s32.totalorder %s61, %s62
    %p76 = scmp.eq.s32.totalorder %s16, 15
    %p77 = por %p75, %p76
    %p79 = scmp.ne.s32.totalorder %s62, %s78
    %p80 = scmp.eq.s32.totalorder %s16, 0
    %p81 = por %p79, %p80
    %s82 = ssub.s32 %s18, %s25
    %p83 = scmp.eq.s32.totalorder %s82, 0
    %s85 = sadd.s32 %s84, 1
    %s86 = scalar_select %p83, %s84, %s85
    %p89 = pneg %p83
    %p90 = scmp.eq.s32.totalorder %s10, 15
    %p91 = por %p89, %p90
    %p92 = scmp.ne.s32.totalorder %s84, %s87
    %p93 = scmp.eq.s32.totalorder %s10, 0
    %p94 = por %p92, %p93
    %p95 = scmp.ne.s32.totalorder %s84, %s87
    %p96 = scmp.eq.s32.totalorder %s15, 15
    %p97 = por %p95, %p96
    %p98 = scmp.ne.s32.totalorder %s87, %s88
    %p99 = scmp.eq.s32.totalorder %s15, 0
    %p100 = por %p98, %p99
    %p101 = scmp.ne.s32.totalorder %s87, %s88
    %p102 = scmp.eq.s32.totalorder %s16, 15
    %p103 = por %p101, %p102
    %p105 = scmp.ne.s32.totalorder %s88, %s104
    %p106 = scmp.eq.s32.totalorder %s16, 0
    %p107 = por %p105, %p106
    %s108 = ssub.s32 %s18, %s25
    %p109 = scmp.eq.s32.totalorder %s108, 0
    %s111 = sadd.s32 %s110, 1
    %s112 = scalar_select %p109, %s110, %s111
    %p115 = pneg %p109
    %p116 = scmp.eq.s32.totalorder %s10, 15
    %p117 = por %p115, %p116
    %p118 = scmp.ne.s32.totalorder %s110, %s113
    %p119 = scmp.eq.s32.totalorder %s10, 0
    %p120 = por %p118, %p119
    %p121 = scmp.ne.s32.totalorder %s110, %s113
    %p122 = scmp.eq.s32.totalorder %s15, 15
    %p123 = por %p121, %p122
    %p124 = scmp.ne.s32.totalorder %s113, %s114
    %p125 = scmp.eq.s32.totalorder %s15, 0
    %p126 = por %p124, %p125
    %p127 = scmp.ne.s32.totalorder %s113, %s114
    %p128 = scmp.eq.s32.totalorder %s16, 15
    %p129 = por %p127, %p128
    %p131 = scmp.ne.s32.totalorder %s114, %s130
    %p132 = scmp.eq.s32.totalorder %s16, 0
    %p133 = por %p131, %p132
    %s134 = ssub.s32 %s17, %s29
    %s135 = ssub.s32 %s18, %s25
    %s136 = sor.u32 %s134, %s135
    %p137 = scmp.eq.s32.totalorder %s136, 0
    %s139 = sadd.s32 %s138, 1
    %s140 = scalar_select %p137, %s138, %s139
    %p143 = pneg %p137
    %p144 = scmp.eq.s32.totalorder %s10, 15
    %p145 = por %p143, %p144
    %p146 = scmp.ne.s32.totalorder %s138, %s141
    %p147 = scmp.eq.s32.totalorder %s10, 0
    %p148 = por %p146, %p147
    %p149 = scmp.ne.s32.totalorder %s138, %s141
    %p150 = scmp.eq.s32.totalorder %s15, 15
    %p151 = por %p149, %p150
    %p152 = scmp.ne.s32.totalorder %s141, %s142
    %p153 = scmp.eq.s32.totalorder %s15, 0
    %p154 = por %p152, %p153
    %p155 = scmp.ne.s32.totalorder %s141, %s142
    %p156 = scmp.eq.s32.totalorder %s16, 15
    %p157 = por %p155, %p156
    %p159 = scmp.ne.s32.totalorder %s142, %s158
    %p160 = scmp.eq.s32.totalorder %s16, 0
    %p161 = por %p159, %p160
    %p162 = scmp.le.s32.totalorder 1, %s10
    %p163 = scmp.lt.s32.totalorder %s10, 17
    %p164 = pnand %p162, %p163
    %p165 = pneg %p164
    // Predicated region
    $region9: #{tpu_custom_call.1} parent=5 // pred_check
      _
    $region10: #{tpu_custom_call.1} parent=5 // pred_check_branch
      %167 = sbr.rel (%p164) target = $region12
    $region11: #{tpu_custom_call.1} parent=5 // pred_region
      %s168 = ssub.s32 %s10, 1
      // Predicated region
      $region13: #{tpu_custom_call.1} parent=11 // pred_check
        %p169 = pneg %p74
      $region14: #{tpu_custom_call.1} parent=11 // pred_check_branch
        %171 = sbr.rel (%p169) target = $region16
      $region15: #{tpu_custom_call.1} parent=11 // pred_region
        %p172 = scmp.lt.s32.totalorder %s20, 0
        %s173 = scalar_select %p172, %s20, 0
        %s174 = smul.addr %s173, 4
        %s175 = scalar_lea.vmem %s1, %s174
      $region16: #{tpu_custom_call.1} parent=11 // pred_fallthru
        _
      // Predicated region
      $region17: #{tpu_custom_call.1} parent=11 // pred_check
        %p176 = pneg %p100
      $region18: #{tpu_custom_call.1} parent=11 // pred_check_branch
        %178 = sbr.rel (%p176) target = $region20
      $region19: #{tpu_custom_call.1} parent=11 // pred_region
        %p179 = scmp.lt.s32.totalorder %s20, 0
        %s180 = scalar_select %p179, %s20, 0
        %s181 = scalar_lea.vmem %s2, %s180
      $region20: #{tpu_custom_call.1} parent=11 // pred_fallthru
        _
      // Predicated region
      $region21: #{tpu_custom_call.1} parent=11 // pred_check
        %p182 = pneg %p126
      $region22: #{tpu_custom_call.1} parent=11 // pred_check_branch
        %184 = sbr.rel (%p182) target = $region24
      $region23: #{tpu_custom_call.1} parent=11 // pred_region
        %p185 = scmp.lt.s32.totalorder %s20, 0
        %s186 = scalar_select %p185, %s20, 0
        %s187 = scalar_lea.vmem %s3, %s186
      $region24: #{tpu_custom_call.1} parent=11 // pred_fallthru
        _
    $region12: #{tpu_custom_call.1} parent=5 // pred_fallthru
      _
    %p188 = scmp.lt.s32.totalorder %s10, 16
    // Predicated region
    $region25: #{tpu_custom_call.1} parent=5 // pred_check
      %p189 = pneg %p188
    $region26: #{tpu_custom_call.1} parent=5 // pred_check_branch
      %191 = sbr.rel (%p189) target = $region28
    $region27: #{tpu_custom_call.1} parent=5 // pred_region
      // Predicated region
      $region29: #{tpu_custom_call.1} parent=27 // pred_check
        %p192 = pneg %p42
      $region30: #{tpu_custom_call.1} parent=27 // pred_check_branch
        %194 = sbr.rel (%p192) target = $region32
      $region31: #{tpu_custom_call.1} parent=27 // pred_region
        %s195 = smul.u32 16, %s17
        %p196 = scmp.lt.s32.totalorder %s195, 255
        %s197 = scalar_select %p196, %s195, 255
        %s198 = smul.addr %s197, 2
        %s199 = smul.addr %s198, 4
        %s200 = scalar_lea.vmem %s0, %s199
        %s201 = smul.u32 16, %s17
      $region32: #{tpu_custom_call.1} parent=27 // pred_fallthru
        _
    $region28: #{tpu_custom_call.1} parent=5 // pred_fallthru
      _
    %p202 = scmp.le.s32.totalorder 1, %s10
    %p203 = scmp.lt.s32.totalorder %s10, 17
    %p204 = pnand %p202, %p203
    %p205 = pneg %p204
    // Predicated region
    $region33: #{tpu_custom_call.1} parent=5 // pred_check
      _
    $region34: #{tpu_custom_call.1} parent=5 // pred_check_branch
      %207 = sbr.rel (%p204) target = $region36
    $region35: #{tpu_custom_call.1} parent=5 // pred_region
      %s208 = ssub.s32 %s10, 1
      %s209 = smul.u32 16, %s19
      %p210 = scmp.lt.s32.totalorder %s209, 255
      %s211 = scalar_select %p210, %s209, 255
      %s212 = smul.addr %s211, 2
      %s213 = smul.addr %s212, 4
      %s214 = scalar_lea.vmem %s0, %s213
      %p215 = pneg %p48
      %p216 = pneg %p45
      %p217 = scmp.lt.s32.totalorder %s20, 0
      %s218 = scalar_select %p217, %s20, 0
      %s219 = smul.addr %s218, 4
      %s220 = scalar_lea.vmem %s1, %s219
      %p221 = pneg %p74
      %p222 = pneg %p71
      %p223 = scmp.lt.s32.totalorder %s20, 0
      %s224 = scalar_select %p223, %s20, 0
      %s225 = scalar_lea.vmem %s2, %s224
      %p226 = pneg %p100
      %p227 = pneg %p97
      %p228 = scmp.lt.s32.totalorder %s20, 0
      %s229 = scalar_select %p228, %s20, 0
      %s230 = scalar_lea.vmem %s3, %s229
      %p231 = pneg %p126
      %p232 = pneg %p123
      %p233 = pneg %p154
      %p234 = pneg %p151
      %s235 = smul.u32 16, %s19
      %p236 = scmp.lt.s32.totalorder %s235, 255
      %s237 = scalar_select %p236, %s235, 255
      %p238 = scmp.lt.s32.totalorder %s20, 0
      %s239 = scalar_select %p238, %s20, 0
      %s240 = sadd.s32 %s239, %s237
      %s241 = smul.addr %s240, 8
      %s242 = scalar_lea.vmem %s4, %s241
      %s243 = smul.u32 16, %s19
      %p244 = scmp.lt.s32.totalorder %s243, 255
      %s245 = scalar_select %p244, %s243, 255
      %s246 = smul.addr %s245, 2
      %s247 = smul.addr %s246, 4
      %s248 = scalar_lea.vmem %s0, %s247
      %s249 = smul.u32 16, %s19
      %p250 = scmp.lt.s32.totalorder %s20, 0
      %s251 = scalar_select %p250, %s20, 0
      %s252 = smul.addr %s251, 4
      %s253 = scalar_lea.vmem %s1, %s252
      %p254 = scmp.lt.s32.totalorder %s20, 0
      %s255 = scalar_select %p254, %s20, 0
      %s256 = scalar_lea.vmem %s2, %s255
      %p257 = scmp.lt.s32.totalorder %s20, 0
      %s258 = scalar_select %p257, %s20, 0
      %s259 = scalar_lea.vmem %s3, %s258
      %s260 = smul.u32 16, %s19
      %p261 = scmp.lt.s32.totalorder %s260, 255
      %s262 = scalar_select %p261, %s260, 255
      %p263 = scmp.lt.s32.totalorder %s20, 0
      %s264 = scalar_select %p263, %s20, 0
      %s265 = sadd.s32 %s264, %s262
      %s266 = smul.addr %s265, 8
      %s267 = scalar_lea.vmem %s4, %s266
      %s268 = smul.u32 16, %s19
      %v270 = vld [vmem:[%s248] sm:$0xff]
      %v271 = vld [vmem:[%s248 + $0x8] sm:$0xff]
      %v272 = vld [vmem:[%s248 + $0x10] sm:$0xff]
      %v273 = vld [vmem:[%s248 + $0x18] sm:$0xff]
      %v274 = vld [vmem:[%s248 + $0x20] sm:$0xff]
      %v275 = vld [vmem:[%s248 + $0x28] sm:$0xff]
      %v276 = vld [vmem:[%s248 + $0x30] sm:$0xff]
      %v277 = vld [vmem:[%s248 + $0x38] sm:$0xff]
      %v278 = vld [vmem:[%s248 + $0x40] sm:$0xff]
      %v279 = vld [vmem:[%s248 + $0x48] sm:$0xff]
      %v280 = vld [vmem:[%s248 + $0x50] sm:$0xff]
      %v281 = vld [vmem:[%s248 + $0x58] sm:$0xff]
      %v282 = vld [vmem:[%s248 + $0x60] sm:$0xff]
      %v283 = vld [vmem:[%s248 + $0x68] sm:$0xff]
      %v284 = vld [vmem:[%s248 + $0x70] sm:$0xff]
      %v285 = vld [vmem:[%s248 + $0x78] sm:$0xff]
      %v286 = vld [vmem:[%s253] sm:$0xf]
      %v287 = vld [vmem:[%s253 + $0x4] sm:$0xf]
      %v288 = vld [vmem:[%s253 + $0x8] sm:$0xf]
      %v289 = vld [vmem:[%s253 + $0xc] sm:$0xf]
      %v290 = vld [vmem:[%s253 + $0x10] sm:$0xf]
      %v291 = vld [vmem:[%s253 + $0x14] sm:$0xf]
      %v292 = vld [vmem:[%s253 + $0x18] sm:$0xf]
      %v293 = vld [vmem:[%s253 + $0x1c] sm:$0xf]
      %v294 = vld [vmem:[%s253 + $0x20] sm:$0xf]
      %v295 = vld [vmem:[%s253 + $0x24] sm:$0xf]
      %v296 = vld [vmem:[%s253 + $0x28] sm:$0xf]
      %v297 = vld [vmem:[%s253 + $0x2c] sm:$0xf]
      %v298 = vld [vmem:[%s253 + $0x30] sm:$0xf]
      %v299 = vld [vmem:[%s253 + $0x34] sm:$0xf]
      %v300 = vld [vmem:[%s253 + $0x38] sm:$0xf]
      %v301 = vld [vmem:[%s253 + $0x3c] sm:$0xf]
      %v302 = vld [vmem:[%s253 + $0x40] sm:$0xf]
      %v303 = vld [vmem:[%s253 + $0x44] sm:$0xf]
      %v304 = vld [vmem:[%s253 + $0x48] sm:$0xf]
      %v305 = vld [vmem:[%s253 + $0x4c] sm:$0xf]
      %v306 = vld [vmem:[%s253 + $0x50] sm:$0xf]
      %v307 = vld [vmem:[%s253 + $0x54] sm:$0xf]
      %v308 = vld [vmem:[%s253 + $0x58] sm:$0xf]
      %v309 = vld [vmem:[%s253 + $0x5c] sm:$0xf]
      %v310 = vld [vmem:[%s253 + $0x60] sm:$0x3]
      %v327 = vunpack.c.l.b16 %v270
      %v328 = vunpack.c.h.b16 %v270
      %v329 = vunpack.c.l.b16 %v271
      %v330 = vunpack.c.h.b16 %v271
      %v331 = vunpack.c.l.b16 %v272
      %v332 = vunpack.c.h.b16 %v272
      %v333 = vunpack.c.l.b16 %v273
      %v334 = vunpack.c.h.b16 %v273
      %v335 = vunpack.c.l.b16 %v274
      %v336 = vunpack.c.h.b16 %v274
      %v337 = vunpack.c.l.b16 %v275
      %v338 = vunpack.c.h.b16 %v275
      %v339 = vunpack.c.l.b16 %v276
      %v340 = vunpack.c.h.b16 %v276
      %v341 = vunpack.c.l.b16 %v277
      %v342 = vunpack.c.h.b16 %v277
      %v343 = vunpack.c.l.b16 %v278
      %v344 = vunpack.c.h.b16 %v278
      %v345 = vunpack.c.l.b16 %v279
      %v346 = vunpack.c.h.b16 %v279
      %v347 = vunpack.c.l.b16 %v280
      %v348 = vunpack.c.h.b16 %v280
      %v349 = vunpack.c.l.b16 %v281
      %v350 = vunpack.c.h.b16 %v281
      %v351 = vunpack.c.l.b16 %v282
      %v352 = vunpack.c.h.b16 %v282
      %v353 = vunpack.c.l.b16 %v283
      %v354 = vunpack.c.h.b16 %v283
      %v355 = vunpack.c.l.b16 %v284
      %v356 = vunpack.c.h.b16 %v284
      %v357 = vunpack.c.l.b16 %v285
      %v358 = vunpack.c.h.b16 %v285
      %v359 = vpack.c.b16 %v329, %v327
      %v360 = vpack.c.b16 %v330, %v328
      %v361 = vpack.c.b16 %v333, %v331
      %v362 = vpack.c.b16 %v334, %v332
      %v363 = vpack.c.b16 %v337, %v335
      %v364 = vpack.c.b16 %v338, %v336
      %v365 = vpack.c.b16 %v341, %v339
      %v366 = vpack.c.b16 %v342, %v340
      %v367 = vpack.c.b16 %v345, %v343
      %v368 = vpack.c.b16 %v346, %v344
      %v369 = vpack.c.b16 %v349, %v347
      %v370 = vpack.c.b16 %v350, %v348
      %v371 = vpack.c.b16 %v353, %v351
      %v372 = vpack.c.b16 %v354, %v352
      %v373 = vpack.c.b16 %v357, %v355
      %v374 = vpack.c.b16 %v358, %v356
      %v408 = vunpack.c.l.b16 %v286
      %v409 = vunpack.c.l.b16 %v287
      %v410 = vunpack.c.l.b16 %v288
      %v411 = vunpack.c.l.b16 %v289
      %v412 = vunpack.c.l.b16 %v290
      %v413 = vunpack.c.l.b16 %v291
      %v414 = vunpack.c.l.b16 %v292
      %v415 = vunpack.c.l.b16 %v293
      %v416 = vunpack.c.l.b16 %v294
      %v417 = vunpack.c.l.b16 %v295
      %v418 = vunpack.c.l.b16 %v296
      %v419 = vunpack.c.l.b16 %v297
      %v420 = vunpack.c.l.b16 %v298
      %v421 = vunpack.c.l.b16 %v299
      %v422 = vunpack.c.l.b16 %v300
      %v423 = vunpack.c.l.b16 %v301
      %v424 = vunpack.c.l.b16 %v302
      %v425 = vunpack.c.l.b16 %v303
      %v426 = vunpack.c.l.b16 %v304
      %v427 = vunpack.c.l.b16 %v305
      %v428 = vunpack.c.l.b16 %v306
      %v429 = vunpack.c.l.b16 %v307
      %v430 = vunpack.c.l.b16 %v308
      %v431 = vunpack.c.l.b16 %v309
      %v432 = vunpack.c.l.b16 %v310
      %v433 = vpack.c.b16 %v409, %v408
      %v434 = vpack.c.b16 %v411, %v410
      %v435 = vpack.c.b16 %v413, %v412
      %v436 = vpack.c.b16 %v415, %v414
      %v437 = vpack.c.b16 %v417, %v416
      %v438 = vpack.c.b16 %v419, %v418
      %v439 = vpack.c.b16 %v421, %v420
      %v440 = vpack.c.b16 %v423, %v422
      %v441 = vpack.c.b16 %v425, %v424
      %v442 = vpack.c.b16 %v427, %v426
      %v443 = vpack.c.b16 %v429, %v428
      %v444 = vpack.c.b16 %v431, %v430
      %v445 = vpack.c.b16 %v432, %v432
      %vm458 = vcmask 556032
      %v460 = vsel %vm458, %v360, 0
      %v463 = vsel %vm458, %v362, 0
      %v466 = vsel %vm458, %v364, 0
      %v469 = vsel %vm458, %v366, 0
      %v472 = vsel %vm458, %v368, 0
      %v475 = vsel %vm458, %v370, 0
      %v478 = vsel %vm458, %v372, 0
      %v481 = vsel %vm458, %v374, 0
      %vm483 = vcmask 1041408
      %v485 = vsel %vm483, %v445, 0
      %487 = vmatprep.subr.bf16.mxu0 0
      %488 = vmatpush1.bf16.msra.mxu0 %v433
      %489 = vmatprep.subr.bf16.mxu0 0
      %490 = vmatpush1.bf16.msra.mxu0 %v434
      %491 = vmatprep.subr.bf16.mxu0 0
      %492 = vmatpush1.bf16.msra.mxu0 %v435
      %493 = vmatprep.subr.bf16.mxu0 0
      %494 = vmatpush1.bf16.msra.mxu0 %v436
      %495 = vmatprep.subr.bf16.mxu0 0
      %496 = vmatpush1.bf16.msra.mxu0 %v437
      %497 = vmatprep.subr.bf16.mxu0 0
      %498 = vmatpush1.bf16.msra.mxu0 %v438
      %499 = vmatprep.subr.bf16.mxu0 0
      %500 = vmatpush1.bf16.msra.mxu0 %v439
      %501 = vmatprep.subr.bf16.mxu0 0
      %502 = vmatpush1.bf16.msra.mxu0 %v440
      %503 = vmatprep.subr.bf16.mxu0 0
      %504 = vmatpush1.bf16.msra.mxu0 %v441
      %505 = vmatprep.subr.bf16.mxu0 0
      %506 = vmatpush1.bf16.msra.mxu0 %v442
      %507 = vmatprep.subr.bf16.mxu0 0
      %508 = vmatpush1.bf16.msra.mxu0 %v443
      %509 = vmatprep.subr.bf16.mxu0 0
      %510 = vmatpush1.bf16.msra.mxu0 %v444
      %511 = vmatprep.subr.bf16.mxu0 0
      %512 = vmatpush1.bf16.msra.mxu0 %v485
      %513 = vmatprep.subr.bf16.mxu0 0
      %514 = vmatpush1.bf16.msra.mxu0 0
      %515 = vmatprep.subr.bf16.mxu0 0
      %516 = vmatpush1.bf16.msra.mxu0 0
      %517 = vmatprep.subr.bf16.mxu0 0
      %518 = vmatpush1.bf16.msra.mxu0 0
      %519 = vmatprep.mubr.bf16.mxu0 %v460
      %520 = vmatmul.mubr.bf16.gmra.mrb[0].mxu0 %v359
      %v521 = vpop.f32.mrb[0].mxu0
      %v522 = vadd.f32 0.0, %v521
      %v523 = vpop.f32.mrb[0].mxu0
      %v524 = vpop.f32.mrb[0].mxu0
      %v525 = vadd.f32 0.0, %v524
      %v526 = vpop.f32.mrb[0].mxu0
      %527 = vmatprep.mubr.bf16.mxu0 %v463
      %528 = vmatmul.mubr.bf16.gmra.mrb[0].mxu0 %v361
      %v529 = vpop.f32.mrb[0].mxu0
      %v530 = vadd.f32 0.0, %v529
      %v531 = vpop.f32.mrb[0].mxu0
      %v532 = vpop.f32.mrb[0].mxu0
      %v533 = vadd.f32 0.0, %v532
      %v534 = vpop.f32.mrb[0].mxu0
      %535 = vmatprep.mubr.bf16.mxu0 %v466
      %536 = vmatmul.mubr.bf16.gmra.mrb[0].mxu0 %v363
      %v537 = vpop.f32.mrb[0].mxu0
      %v538 = vadd.f32 0.0, %v537
      %v539 = vpop.f32.mrb[0].mxu0
      %v540 = vpop.f32.mrb[0].mxu0
      %v541 = vadd.f32 0.0, %v540
      %v542 = vpop.f32.mrb[0].mxu0
      %543 = vmatprep.mubr.bf16.mxu0 %v469
      %544 = vmatmul.mubr.bf16.gmra.mrb[0].mxu0 %v365
      %v545 = vpop.f32.mrb[0].mxu0
      %v546 = vadd.f32 0.0, %v545
      %v547 = vpop.f32.mrb[0].mxu0
      %v548 = vpop.f32.mrb[0].mxu0
      %v549 = vadd.f32 0.0, %v548
      %v550 = vpop.f32.mrb[0].mxu0
      %551 = vmatprep.mubr.bf16.mxu0 %v472
      %552 = vmatmul.mubr.bf16.gmra.mrb[0].mxu0 %v367
      %v553 = vpop.f32.mrb[0].mxu0
      %v554 = vadd.f32 0.0, %v553
      %v555 = vpop.f32.mrb[0].mxu0
      %v556 = vpop.f32.mrb[0].mxu0
      %v557 = vadd.f32 0.0, %v556
      %v558 = vpop.f32.mrb[0].mxu0
      %559 = vmatprep.mubr.bf16.mxu0 %v475
      %560 = vmatmul.mubr.bf16.gmra.mrb[0].mxu0 %v369
      %v561 = vpop.f32.mrb[0].mxu0
      %v562 = vadd.f32 0.0, %v561
      %v563 = vpop.f32.mrb[0].mxu0
      %v564 = vpop.f32.mrb[0].mxu0
      %v565 = vadd.f32 0.0, %v564
      %v566 = vpop.f32.mrb[0].mxu0
      %567 = vmatprep.mubr.bf16.mxu0 %v478
      %568 = vmatmul.mubr.bf16.gmra.mrb[0].mxu0 %v371
      %v569 = vpop.f32.mrb[0].mxu0
      %v570 = vadd.f32 0.0, %v569
      %v571 = vpop.f32.mrb[0].mxu0
      %v572 = vpop.f32.mrb[0].mxu0
      %v573 = vadd.f32 0.0, %v572
      %v574 = vpop.f32.mrb[0].mxu0
      %575 = vmatprep.mubr.bf16.mxu0 %v481
      %576 = vmatmul.mubr.bf16.gmra.mrb[0].mxu0 %v373
      %v577 = vpop.f32.mrb[0].mxu0
      %v578 = vadd.f32 0.0, %v577
      %v579 = vpop.f32.mrb[0].mxu0
      %v580 = vpop.f32.mrb[0].mxu0
      %v581 = vadd.f32 0.0, %v580
      %v582 = vpop.f32.mrb[0].mxu0
      %583 = vdwg.mxu0
      %v584 = vld [vmem:[%s256] sm:$0x1]
      %v585 = vld [vmem:[%s259] sm:$0x1]
      %v587 = vlaneseq
      %v588 = vshrl.u32 %v587, 7
      %v589 = vsub.s32 0, %v588
      %v590 = vrot.slane %v584, %v589
      %v592 = vmul.f32 %v522, %v590
      %v593 = vmul.f32 %v525, %v590
      %v594 = vmul.f32 %v530, %v590
      %v595 = vmul.f32 %v533, %v590
      %v596 = vmul.f32 %v538, %v590
      %v597 = vmul.f32 %v541, %v590
      %v598 = vmul.f32 %v546, %v590
      %v599 = vmul.f32 %v549, %v590
      %v600 = vmul.f32 %v554, %v590
      %v601 = vmul.f32 %v557, %v590
      %v602 = vmul.f32 %v562, %v590
      %v603 = vmul.f32 %v565, %v590
      %v604 = vmul.f32 %v570, %v590
      %v605 = vmul.f32 %v573, %v590
      %v606 = vmul.f32 %v578, %v590
      %v607 = vmul.f32 %v581, %v590
      %v609 = vlaneseq
      %v610 = vshrl.u32 %v609, 7
      %v611 = vsub.s32 0, %v610
      %v612 = vrot.slane %v585, %v611
      %v614 = vadd.f32 %v592, %v612
      %v615 = vadd.f32 %v593, %v612
      %v616 = vadd.f32 %v594, %v612
      %v617 = vadd.f32 %v595, %v612
      %v618 = vadd.f32 %v596, %v612
      %v619 = vadd.f32 %v597, %v612
      %v620 = vadd.f32 %v598, %v612
      %v621 = vadd.f32 %v599, %v612
      %v622 = vadd.f32 %v600, %v612
      %v623 = vadd.f32 %v601, %v612
      %v624 = vadd.f32 %v602, %v612
      %v625 = vadd.f32 %v603, %v612
      %v626 = vadd.f32 %v604, %v612
      %v627 = vadd.f32 %v605, %v612
      %v628 = vadd.f32 %v606, %v612
      %v629 = vadd.f32 %v607, %v612
      %v630 = vmax.f32 %v614, 0.0
      %v631 = vmax.f32 %v615, 0.0
      %v632 = vmax.f32 %v616, 0.0
      %v633 = vmax.f32 %v617, 0.0
      %v634 = vmax.f32 %v618, 0.0
      %v635 = vmax.f32 %v619, 0.0
      %v636 = vmax.f32 %v620, 0.0
      %v637 = vmax.f32 %v621, 0.0
      %v638 = vmax.f32 %v622, 0.0
      %v639 = vmax.f32 %v623, 0.0
      %v640 = vmax.f32 %v624, 0.0
      %v641 = vmax.f32 %v625, 0.0
      %v642 = vmax.f32 %v626, 0.0
      %v643 = vmax.f32 %v627, 0.0
      %v644 = vmax.f32 %v628, 0.0
      %v645 = vmax.f32 %v629, 0.0
      %vm646 = vcmask 523264
      %647 = vst.msk [vmem:[%s267] sm:$0xff] %vm646, %v630
      %648 = vst.msk [vmem:[%s267 + $0x8] sm:$0xff] %vm646, %v631
      %649 = vst.msk [vmem:[%s267 + $0x10] sm:$0xff] %vm646, %v632
      %650 = vst.msk [vmem:[%s267 + $0x18] sm:$0xff] %vm646, %v633
      %651 = vst.msk [vmem:[%s267 + $0x20] sm:$0xff] %vm646, %v634
      %652 = vst.msk [vmem:[%s267 + $0x28] sm:$0xff] %vm646, %v635
      %653 = vst.msk [vmem:[%s267 + $0x30] sm:$0xff] %vm646, %v636
      %654 = vst.msk [vmem:[%s267 + $0x38] sm:$0xff] %vm646, %v637
      %655 = vst.msk [vmem:[%s267 + $0x40] sm:$0xff] %vm646, %v638
      %656 = vst.msk [vmem:[%s267 + $0x48] sm:$0xff] %vm646, %v639
      %657 = vst.msk [vmem:[%s267 + $0x50] sm:$0xff] %vm646, %v640
      %658 = vst.msk [vmem:[%s267 + $0x58] sm:$0xff] %vm646, %v641
      %659 = vst.msk [vmem:[%s267 + $0x60] sm:$0xff] %vm646, %v642
      %660 = vst.msk [vmem:[%s267 + $0x68] sm:$0xff] %vm646, %v643
      %661 = vst.msk [vmem:[%s267 + $0x70] sm:$0xff] %vm646, %v644
      %662 = vst.msk [vmem:[%s267 + $0x78] sm:$0xff] %vm646, %v645
      %s663 = smul.u32 16, %s19
      %p664 = scmp.lt.s32.totalorder %s663, 255
      %s665 = scalar_select %p664, %s663, 255
      %p666 = scmp.lt.s32.totalorder %s20, 0
      %s667 = scalar_select %p666, %s20, 0
      %s668 = sadd.s32 %s667, %s665
      %s669 = smul.addr %s668, 8
      %s670 = scalar_lea.vmem %s4, %s669
      // Predicated region
      $region37: #{tpu_custom_call.1} parent=35 // pred_check
        %p671 = pneg %p151
      $region38: #{tpu_custom_call.1} parent=35 // pred_check_branch
        %673 = sbr.rel (%p671) target = $region40
      $region39: #{tpu_custom_call.1} parent=35 // pred_region
        %s674 = smul.u32 16, %s19
      $region40: #{tpu_custom_call.1} parent=35 // pred_fallthru
        _
    $region36: #{tpu_custom_call.1} parent=5 // pred_fallthru
      _
    %p675 = scmp.le.s32.totalorder 2, %s10
    // Predicated region
    $region41: #{tpu_custom_call.1} parent=5 // pred_check
      %p676 = pneg %p675
    $region42: #{tpu_custom_call.1} parent=5 // pred_check_branch
      %678 = sbr.rel (%p676) target = $region44
    $region43: #{tpu_custom_call.1} parent=5 // pred_region
      %s679 = ssub.s32 %s10, 2
      // Predicated region
      $region45: #{tpu_custom_call.1} parent=43 // pred_check
        %p680 = pneg %p157
      $region46: #{tpu_custom_call.1} parent=43 // pred_check_branch
        %682 = sbr.rel (%p680) target = $region48
      $region47: #{tpu_custom_call.1} parent=43 // pred_region
        %s683 = smul.u32 16, %s21
        %p684 = scmp.lt.s32.totalorder %s683, 255
        %s685 = scalar_select %p684, %s683, 255
        %p686 = scmp.lt.s32.totalorder %s22, 0
        %s687 = scalar_select %p686, %s22, 0
        %s688 = sadd.s32 %s687, %s685
        %s689 = smul.addr %s688, 8
        %s690 = scalar_lea.vmem %s4, %s689
      $region48: #{tpu_custom_call.1} parent=43 // pred_fallthru
        _
    $region44: #{tpu_custom_call.1} parent=5 // pred_fallthru
      _
  $region6: #{tpu_custom_call.1} parent=0 // loop_footer
    %s14 = sadd.s32 1, %s10
  $region7: #{tpu_custom_call.1} parent=0 // loop_footer_branch
    %9 = sbr.rel target = $region3
  $region8: #{tpu_custom_call.1} parent=0 // loop_exit
    _

</llo_original>
